<compile_context>
chip_gen: v6e
topology: v6e:2x2x1
jax: 0.10.0
libtpu: 0.0.40
codegen_flags: <defaults>
</compile_context>

<pallas_src>
import math

import jax
import jax.numpy as jnp
from jax.experimental import pallas as pl
from jax.experimental.pallas import tpu as pltpu


def _glu_kernel(a_ref, g_ref, o_ref):
    # a_ref / g_ref / o_ref: (R_blk, 128) lane-dense tiles.
    # Compute in f32 (no-op for f32; avoids bf16 pack/unpack on the VPU for
    # bf16 inputs, esp. on v5e) and cast only at the store.
    a = a_ref[...].astype(jnp.float32)
    g = g_ref[...].astype(jnp.float32)
    o_ref[...] = (a * jax.nn.sigmoid(g)).astype(o_ref.dtype)


def _round_up(n, m):
    return -(-n // m) * m


def _choose_row_tiling(M, itemsize, budget_bytes=12 * 1024 * 1024):
    """Tile a length-M half into (R_pad rows x 128 lanes) row blocks.

    Per-grid-step VMEM ~= 2 (double buffer) * 3 (a, g, out) * R_blk*128*itemsize.
    A 12 MiB budget fits the default scoped VMEM on v5e/v6e/v7x with headroom
    (~2 MiB tiles for f32/bf16).  Returns (R_pad, R_blk, nR), R_pad = nR*R_blk.
    """
    rows = -(-M // 128)
    max_rows = max(8, (budget_bytes // (2 * 3 * 128 * itemsize)) // 8 * 8)
    if rows <= max_rows:
        # Single block == full dim: exempt from the (8,128) sublane rule,
        # and no extra divisibility padding.
        return rows, rows, 1
    # Balanced blocking: pad waste < n_blocks * 8 rows (negligible).
    n_blocks = -(-rows // max_rows)
    r_blk = _round_up(-(-rows // n_blocks), 8)
    return n_blocks * r_blk, r_blk, n_blocks


def glu(x, dim: int = 1):
    """outputs, gate = chunk(x, 2, dim); return outputs * sigmoid(gate)."""
    d = dim % x.ndim
    n = x.shape[d]
    assert n % 2 == 0, "split dim must be even for chunk(2)"
    half = n // 2
    prefix = math.prod(x.shape[:d])
    suffix = math.prod(x.shape[d + 1:])
    M = half * suffix
    out_shape = x.shape[:d] + (half,) + x.shape[d + 1:]

    # Pure-view reshape: halves of dim `d` -> index 0/1 of the middle axis.
    xr = x.reshape(prefix, 2, M)

    itemsize = jnp.dtype(x.dtype).itemsize
    R_pad, R_blk, nR = _choose_row_tiling(M, itemsize)
    M_pad = R_pad * 128
    if M_pad != M:
        # One extra HBM pass, only when the half isn't already lane-aligned.
        xr = jnp.pad(xr, ((0, 0), (0, 0), (0, M_pad - M)))
    xv = xr.reshape(prefix, 2, R_pad, 128)

    out = pl.pallas_call(
        _glu_kernel,
        out_shape=jax.ShapeDtypeStruct((prefix, R_pad, 128), x.dtype),
        grid_spec=pltpu.PrefetchScalarGridSpec(
            num_scalar_prefetch=0,
            grid=(prefix, nR),
            in_specs=[
                # "outputs" half: block index 0 along the half axis.
                pl.BlockSpec((None, None, R_blk, 128), lambda p, r: (p, 0, r, 0)),
                # "gate" half: block index 1 along the half axis.
                pl.BlockSpec((None, None, R_blk, 128), lambda p, r: (p, 1, r, 0)),
            ],
            out_specs=pl.BlockSpec((None, R_blk, 128), lambda p, r: (p, r, 0)),
        ),
        compiler_params=pltpu.CompilerParams(
            dimension_semantics=("parallel", "parallel")),
    )(xv, xv)

    out = out.reshape(prefix, M_pad)
    if M_pad != M:
        out = out[:, :M]
    return out.reshape(out_shape)


def _ref_glu(x, dim=1):
    a, g = jnp.split(x, 2, axis=dim)
    return a * jax.nn.sigmoid(g)


if __name__ == "__main__":
    key = jax.random.PRNGKey(0)

    # Base case: B=2, C2=4, 16x16 spatial (dim=1, already lane-aligned).
    x = jax.random.normal(key, (2, 4, 16, 16), dtype=jnp.float32)
    y = glu(x, dim=1)
    jax.block_until_ready(y)
    ref = _ref_glu(x, dim=1)
    assert y.shape == ref.shape == (2, 2, 16, 16)
    assert jnp.allclose(y, ref, atol=1e-6), "f32 mismatch vs reference"

    # Non-lane-aligned spatial size (exercises the padding path).
    x2 = jax.random.normal(jax.random.PRNGKey(1), (1, 8, 10, 10), dtype=jnp.float32)
    y2 = glu(x2, dim=1)
    jax.block_until_ready(y2)
    assert jnp.allclose(y2, _ref_glu(x2, dim=1), atol=1e-6), "padded mismatch"

    # bf16 inputs: kernel computes in f32 and casts at the store.
    x3 = jax.random.normal(jax.random.PRNGKey(2), (2, 8, 16, 16), dtype=jnp.bfloat16)
    y3 = glu(x3, dim=1)
    jax.block_until_ready(y3)
    ref3 = _ref_glu(x3.astype(jnp.float32), dim=1)
    assert jnp.allclose(y3.astype(jnp.float32), ref3, atol=5e-2), "bf16 mismatch"

    # Generic dim: split along the last axis of a (B, T, H) activation.
    x4 = jax.random.normal(jax.random.PRNGKey(3), (2, 8, 32), dtype=jnp.float32)
    y4 = glu(x4, dim=-1)
    jax.block_until_ready(y4)
    assert jnp.allclose(y4, _ref_glu(x4, dim=-1), atol=1e-6), "dim=-1 mismatch"

    print("KERNEL_OK")
</pallas_src>

<mosaic_0001>
module attributes {stable_mosaic.version = 11 : i64} {
  func.func @_glu_kernel(%arg0: i32, %arg1: i32, %arg2: memref<1x1x4x128xf32, #tpu.memory_space<vmem>>, %arg3: memref<1x1x4x128xf32, #tpu.memory_space<vmem>>, %arg4: memref<1x4x128xf32, #tpu.memory_space<vmem>>) attributes {dimension_semantics = [#tpu.dimension_semantics<parallel>, #tpu.dimension_semantics<parallel>], iteration_bounds = array<i64: 2, 1>, scalar_prefetch = 0 : i64, scratch_operands = 0 : i64, tpu.core_type = #tpu.core_type<tc>, window_params = [{transform_indices = @transform_0, window_bounds = array<i64: 1, 1, 4, 128>}, {transform_indices = @transform_1, window_bounds = array<i64: 1, 1, 4, 128>}, {transform_indices = @transform_2, window_bounds = array<i64: 1, 4, 128>}]} {
    %c0 = arith.constant 0 : index
    %c0_0 = arith.constant 0 : index
    %c0_1 = arith.constant 0 : index
    %c0_2 = arith.constant 0 : index
    %0 = vector.load %arg2[%c0, %c0_0, %c0_1, %c0_2] : memref<1x1x4x128xf32, #tpu.memory_space<vmem>>, vector<1x1x4x128xf32>
    %1 = vector.shape_cast %0 : vector<1x1x4x128xf32> to vector<4x128xf32>
    %c0_3 = arith.constant 0 : index
    %c0_4 = arith.constant 0 : index
    %c0_5 = arith.constant 0 : index
    %c0_6 = arith.constant 0 : index
    %2 = vector.load %arg3[%c0_3, %c0_4, %c0_5, %c0_6] : memref<1x1x4x128xf32, #tpu.memory_space<vmem>>, vector<1x1x4x128xf32>
    %3 = vector.shape_cast %2 : vector<1x1x4x128xf32> to vector<4x128xf32>
    %4 = arith.negf %3 : vector<4x128xf32>
    %5 = math.exp %4 : vector<4x128xf32>
    %cst = arith.constant 1.000000e+00 : f32
    %6 = vector.broadcast %cst : f32 to vector<4x128xf32>
    %7 = arith.addf %6, %5 : vector<4x128xf32>
    %8 = arith.divf %6, %7 : vector<4x128xf32>
    %9 = arith.mulf %1, %8 : vector<4x128xf32>
    %c0_7 = arith.constant 0 : index
    %c0_8 = arith.constant 0 : index
    %c0_9 = arith.constant 0 : index
    %10 = vector.load %arg4[%c0_7, %c0_8, %c0_9] : memref<1x4x128xf32, #tpu.memory_space<vmem>>, vector<1x4x128xf32>
    %11 = vector.shape_cast %10 : vector<1x4x128xf32> to vector<4x128xf32>
    %12 = vector.shape_cast %9 : vector<4x128xf32> to vector<1x4x128xf32>
    tpu.vector_store %arg4[%c0_7, %c0_8, %c0_9], %12 {strides = array<i32>} : memref<1x4x128xf32, #tpu.memory_space<vmem>>, vector<1x4x128xf32>,
    return
  }
  func.func @transform_0(%arg0: i32, %arg1: i32) -> (i32, i32, i32, i32) {
    %c0_i32 = arith.constant 0 : i32
    %c0_i32_0 = arith.constant 0 : i32
    %c0_i32_1 = arith.constant 0 : i32
    return %arg0, %c0_i32, %arg1, %c0_i32_0 : i32, i32, i32, i32
  }
  func.func @transform_1(%arg0: i32, %arg1: i32) -> (i32, i32, i32, i32) {
    %c1_i32 = arith.constant 1 : i32
    %c0_i32 = arith.constant 0 : i32
    %c0_i32_0 = arith.constant 0 : i32
    return %arg0, %c1_i32, %arg1, %c0_i32 : i32, i32, i32, i32
  }
  func.func @transform_2(%arg0: i32, %arg1: i32) -> (i32, i32, i32) {
    %c0_i32 = arith.constant 0 : i32
    %c0_i32_0 = arith.constant 0 : i32
    return %arg0, %arg1, %c0_i32 : i32, i32, i32
  }
}

</mosaic_0001>

<llo_original>
// kernel: tpu_custom_call.1
$region0: #{tpu_custom_call.1}
  #allocation0 [shape = 'u32[]', space=smem, size = 0x4, offset = 0x4, fixed_abs, tag = 'smem constant byte address 0x4 - core index']
  #allocation1 [shape = 'u32[144,128]{1,0:T(1,128)}', space=vmem, size = 0x12000, scoped, tag = 'internal scratch']
  %s0 = inlined_call_operand.hbm [shape: f32[2,2,4,128], index: 0, kind: input, shape index: {}]
  %s1 = inlined_call_operand.hbm [shape: f32[2,2,4,128], index: 1, kind: input, shape index: {}]
  %s2 = inlined_call_operand.hbm [shape: f32[2,4,128], index: 2, kind: output, shape index: {}]
  %s3 = sld [smem:[#allocation0]]
  $region49: #{tpu_custom_call.1} parent=0
    _
  %s5 = ssub.s32 1, %s3
  %s6 = scalar_select 0, %s5, %s3
  $region1: #{tpu_custom_call.1} parent=0
    #allocation2 [shape = 'u8[4096]{0}', space=vmem, size = 0x1000, scoped, tag = 'input window, operand 0']
    #allocation3 [shape = 's32[2]{0}', space=sflag, size = 0x8, scoped, tag = 'scoped memory for tpu_custom_call.1']
    #allocation4 [shape = 's32[2]{0}', space=sflag, size = 0x8, scoped, tag = 'scoped memory for tpu_custom_call.1']
    #allocation5 [shape = 'u8[4096]{0}', space=vmem, size = 0x1000, scoped, tag = 'input window, operand 1']
    #allocation6 [shape = 's32[2]{0}', space=sflag, size = 0x8, scoped, tag = 'scoped memory for tpu_custom_call.1']
    #allocation7 [shape = 'u8[4096]{0}', space=vmem, size = 0x1000, scoped, tag = 'output window, operand 0']
    %7 = vsyncpa [#allocation3], 0
    %s8 = scalar_lea.sflag [#allocation3], 1
    %9 = vsyncpa %s8, 0
    %10 = vsyncpa [#allocation6], 0
    %s11 = scalar_lea.sflag [#allocation6], 1
    %12 = vsyncpa %s11, 0
    %13 = vsyncpa [#allocation4], 0
    %s14 = scalar_lea.sflag [#allocation4], 1
    %15 = vsyncpa %s14, 0
    loop: start=0, step=1, limit=4
    $region2: #{tpu_custom_call.1} parent=1 // loop_pre_header
      _
    $region3: #{tpu_custom_call.1} parent=1 // loop_header
      %s17 = sphi 0, %s21
      %p18 = scmp.ge.s32.totalorder %s17, 4
      %s24 = sphi 0, %s36
      %s25 = sphi 0, %s32
      %s26 = sphi 0, %s24
      %s27 = sphi 0, %s25
      %s28 = sphi 0, %s26
      %s29 = sphi 0, %s27
      %s41 = sphi 0, %s43
      %s44 = sphi 0, %s41
      %s45 = sphi 0, %s44
      %s61 = sphi 0, %s45
      %s69 = sphi 0, %s71
      %s72 = sphi 0, %s69
      %s73 = sphi 0, %s72
      %s89 = sphi 0, %s73
      %s97 = sphi 0, %s99
      %s100 = sphi 0, %s97
      %s101 = sphi 0, %s100
      %s117 = sphi 0, %s101
    $region4: #{tpu_custom_call.1} parent=1 // loop_header_branch
      %20 = sbr.rel (%p18) target = $region8
    $region5: #{tpu_custom_call.1} parent=1 // loop_body
      %s22 = ssub.s32 %s17, 1
      %s23 = ssub.s32 %s17, 2
      %s30 = sadd.s32 1, %s25
      %p31 = scmp.ge.s32.totalorder %s30, 1
      %s32 = scalar_select %p31, 0, %s30
      %s33 = sadd.s32 1, %s24
      %s34 = scalar_select %p31, %s33, %s24
      %p35 = scmp.ge.s32.totalorder %s34, 2
      %s36 = scalar_select %p35, 0, %s34
      %s37 = ssub.s32 %s24, %s36
      %s38 = ssub.s32 %s25, %s32
      %s39 = sor.u32 %s37, %s38
      %p40 = scmp.eq.s32.totalorder %s39, 0
      %s42 = sadd.s32 %s41, 1
      %s43 = scalar_select %p40, %s41, %s42
      %p46 = pneg %p40
      %p47 = scmp.eq.s32.totalorder %s17, 1
      %p48 = por %p46, %p47
      %p49 = scmp.ne.s32.totalorder %s41, %s44
      %p50 = scmp.eq.s32.totalorder %s17, 0
      %p51 = por %p49, %p50
      %p52 = scmp.ne.s32.totalorder %s41, %s44
      %p53 = scmp.eq.s32.totalorder %s22, 1
      %p54 = por %p52, %p53
      %p55 = scmp.ne.s32.totalorder %s44, %s45
      %p56 = scmp.eq.s32.totalorder %s22, 0
      %p57 = por %p55, %p56
      %p58 = scmp.ne.s32.totalorder %s44, %s45
      %p59 = scmp.eq.s32.totalorder %s23, 1
      %p60 = por %p58, %p59
      %p62 = scmp.ne.s32.totalorder %s45, %s61
      %p63 = scmp.eq.s32.totalorder %s23, 0
      %p64 = por %p62, %p63
      %s65 = ssub.s32 %s24, %s36
      %s66 = ssub.s32 %s25, %s32
      %s67 = sor.u32 %s65, %s66
      %p68 = scmp.eq.s32.totalorder %s67, 0
      %s70 = sadd.s32 %s69, 1
      %s71 = scalar_select %p68, %s69, %s70
      %p74 = pneg %p68
      %p75 = scmp.eq.s32.totalorder %s17, 1
      %p76 = por %p74, %p75
      %p77 = scmp.ne.s32.totalorder %s69, %s72
      %p78 = scmp.eq.s32.totalorder %s17, 0
      %p79 = por %p77, %p78
      %p80 = scmp.ne.s32.totalorder %s69, %s72
      %p81 = scmp.eq.s32.totalorder %s22, 1
      %p82 = por %p80, %p81
      %p83 = scmp.ne.s32.totalorder %s72, %s73
      %p84 = scmp.eq.s32.totalorder %s22, 0
      %p85 = por %p83, %p84
      %p86 = scmp.ne.s32.totalorder %s72, %s73
      %p87 = scmp.eq.s32.totalorder %s23, 1
      %p88 = por %p86, %p87
      %p90 = scmp.ne.s32.totalorder %s73, %s89
      %p91 = scmp.eq.s32.totalorder %s23, 0
      %p92 = por %p90, %p91
      %s93 = ssub.s32 %s24, %s36
      %s94 = ssub.s32 %s25, %s32
      %s95 = sor.u32 %s93, %s94
      %p96 = scmp.eq.s32.totalorder %s95, 0
      %s98 = sadd.s32 %s97, 1
      %s99 = scalar_select %p96, %s97, %s98
      %p102 = pneg %p96
      %p103 = scmp.eq.s32.totalorder %s17, 1
      %p104 = por %p102, %p103
      %p105 = scmp.ne.s32.totalorder %s97, %s100
      %p106 = scmp.eq.s32.totalorder %s17, 0
      %p107 = por %p105, %p106
      %p108 = scmp.ne.s32.totalorder %s97, %s100
      %p109 = scmp.eq.s32.totalorder %s22, 1
      %p110 = por %p108, %p109
      %p111 = scmp.ne.s32.totalorder %s100, %s101
      %p112 = scmp.eq.s32.totalorder %s22, 0
      %p113 = por %p111, %p112
      %p114 = scmp.ne.s32.totalorder %s100, %s101
      %p115 = scmp.eq.s32.totalorder %s23, 1
      %p116 = por %p114, %p115
      %p118 = scmp.ne.s32.totalorder %s101, %s117
      %p119 = scmp.eq.s32.totalorder %s23, 0
      %p120 = por %p118, %p119
      %p121 = scmp.le.s32.totalorder 1, %s17
      %p122 = scmp.lt.s32.totalorder %s17, 3
      %p123 = pnand %p121, %p122
      %p124 = pneg %p123
      // Predicated region
      $region9: #{tpu_custom_call.1} parent=5 // pred_check
        _
      $region10: #{tpu_custom_call.1} parent=5 // pred_check_branch
        %126 = sbr.rel (%p123) target = $region12
      $region11: #{tpu_custom_call.1} parent=5 // pred_region
        %s127 = ssub.s32 %s17, 1
      $region12: #{tpu_custom_call.1} parent=5 // pred_fallthru
        _
      %p128 = scmp.lt.s32.totalorder %s17, 2
      // Predicated region
      $region13: #{tpu_custom_call.1} parent=5 // pred_check
        %p129 = pneg %p128
      $region14: #{tpu_custom_call.1} parent=5 // pred_check_branch
        %131 = sbr.rel (%p129) target = $region16
      $region15: #{tpu_custom_call.1} parent=5 // pred_region
        // Predicated region
        $region17: #{tpu_custom_call.1} parent=15 // pred_check
          %p132 = pneg %p51
        $region18: #{tpu_custom_call.1} parent=15 // pred_check_branch
          %134 = sbr.rel (%p132) target = $region20
        $region19: #{tpu_custom_call.1} parent=15 // pred_region
          %s135 = sand.u32 %s41, 1
          %s136 = scalar_lea.sflag [#allocation3], %s135
          %s137 = sand.u32 %s41, 1
          %s138 = smul.addr %s137, 4
          %s139 = scalar_lea.vmem [#allocation2], %s138
          %s141 = ssub.s32 64, 64
          %142 = vsyncadd %s136, %s141
          %s143 = smul.addr %s24, 2
          %s144 = sadd.s32 %s25, %s143
          %s145 = smul.addr %s144, 64
          %s146 = scalar_lea.hbm %s0, %s145
          %s148 = sshll.u32 %s139, 4
          %s149 = int_to_ptr.vmem [resolvable:$true] %s148
          %151 = dma.hbm_to_vmem [thread:$0]  %s146, 64, %s149, %s136
        $region20: #{tpu_custom_call.1} parent=15 // pred_fallthru
          _
        // Predicated region
        $region21: #{tpu_custom_call.1} parent=15 // pred_check
          %p152 = pneg %p79
        $region22: #{tpu_custom_call.1} parent=15 // pred_check_branch
          %154 = sbr.rel (%p152) target = $region24
        $region23: #{tpu_custom_call.1} parent=15 // pred_region
          %s155 = sand.u32 %s69, 1
          %s156 = scalar_lea.sflag [#allocation6], %s155
          %s157 = sand.u32 %s69, 1
          %s158 = smul.addr %s157, 4
          %s159 = scalar_lea.vmem [#allocation5], %s158
          %s161 = ssub.s32 64, 64
          %162 = vsyncadd %s156, %s161
          %s163 = sadd.s32 %s25, 1
          %s164 = smul.addr %s24, 2
          %s165 = sadd.s32 %s163, %s164
          %s166 = smul.addr %s165, 64
          %s167 = scalar_lea.hbm %s1, %s166
          %s169 = sshll.u32 %s159, 4
          %s170 = int_to_ptr.vmem [resolvable:$true] %s169
          %172 = dma.hbm_to_vmem [thread:$0]  %s167, 64, %s170, %s156
        $region24: #{tpu_custom_call.1} parent=15 // pred_fallthru
          _
      $region16: #{tpu_custom_call.1} parent=5 // pred_fallthru
        _
      %p173 = scmp.le.s32.totalorder 1, %s17
      %p174 = scmp.lt.s32.totalorder %s17, 3
      %p175 = pnand %p173, %p174
      %p176 = pneg %p175
      // Predicated region
      $region25: #{tpu_custom_call.1} parent=5 // pred_check
        _
      $region26: #{tpu_custom_call.1} parent=5 // pred_check_branch
        %178 = sbr.rel (%p175) target = $region28
      $region27: #{tpu_custom_call.1} parent=5 // pred_region
        %s179 = ssub.s32 %s17, 1
        %s180 = sand.u32 %s44, 1
        %s181 = scalar_lea.sflag [#allocation3], %s180
        %s182 = sand.u32 %s44, 1
        %s183 = smul.addr %s182, 4
        %s184 = scalar_lea.vmem [#allocation2], %s183
        // Predicated region
        $region29: #{tpu_custom_call.1} parent=27 // pred_check
          %p185 = pneg %p57
        $region30: #{tpu_custom_call.1} parent=27 // pred_check_branch
          %187 = sbr.rel (%p185) target = $region32
        $region31: #{tpu_custom_call.1} parent=27 // pred_region
          %188 = dma.done %s181, 64
        $region32: #{tpu_custom_call.1} parent=27 // pred_fallthru
          _
        %s189 = sand.u32 %s72, 1
        %s190 = scalar_lea.sflag [#allocation6], %s189
        %s191 = sand.u32 %s72, 1
        %s192 = smul.addr %s191, 4
        %s193 = scalar_lea.vmem [#allocation5], %s192
        // Predicated region
        $region33: #{tpu_custom_call.1} parent=27 // pred_check
          %p194 = pneg %p85
        $region34: #{tpu_custom_call.1} parent=27 // pred_check_branch
          %196 = sbr.rel (%p194) target = $region36
        $region35: #{tpu_custom_call.1} parent=27 // pred_region
          %197 = dma.done %s190, 64
        $region36: #{tpu_custom_call.1} parent=27 // pred_fallthru
          _
        %s198 = sand.u32 %s44, 1
        %s199 = scalar_lea.sflag [#allocation3], %s198
        %s200 = sand.u32 %s44, 1
        %s201 = smul.addr %s200, 4
        %s202 = scalar_lea.vmem [#allocation2], %s201
        %p203 = pneg %p57
        %p204 = pneg %p54
        %s205 = sand.u32 %s72, 1
        %s206 = scalar_lea.sflag [#allocation6], %s205
        %s207 = sand.u32 %s72, 1
        %s208 = smul.addr %s207, 4
        %s209 = scalar_lea.vmem [#allocation5], %s208
        %p210 = pneg %p85
        %p211 = pneg %p82
        %p212 = pneg %p113
        %p213 = pneg %p110
        %s214 = sand.u32 %s100, 1
        %s215 = scalar_lea.sflag [#allocation4], %s214
        %s216 = sand.u32 %s100, 1
        %s217 = smul.addr %s216, 4
        %s218 = scalar_lea.vmem [#allocation7], %s217
        %v219 = vld [vmem:[%s184] sm:$0xf]
        %v220 = vld [vmem:[%s193] sm:$0xf]
        %v221 = vxor.u32 %v220, 2147483648
        %v222 = vmul.f32 %v221, 1.442695
        %v223 = vpow.pop %v222
        %v224 = vadd.f32 %v223, 1.0
        %v225 = vrcp.pop %v224
        %v226 = vmul.f32 1.0, %v225
        %v227 = vmul.f32 %v219, %v226
        %228 = vst [vmem:[%s218] sm:$0xf] %v227
        %s229 = sand.u32 %s100, 1
        %s230 = scalar_lea.sflag [#allocation4], %s229
        %s231 = sand.u32 %s100, 1
        %s232 = smul.addr %s231, 4
        %s233 = scalar_lea.vmem [#allocation7], %s232
        // Predicated region
        $region37: #{tpu_custom_call.1} parent=27 // pred_check
          %p234 = pneg %p110
        $region38: #{tpu_custom_call.1} parent=27 // pred_check_branch
          %236 = sbr.rel (%p234) target = $region40
        $region39: #{tpu_custom_call.1} parent=27 // pred_region
          %s238 = ssub.s32 64, 64
          %239 = vsyncadd %s230, %s238
          %s240 = sadd.s32 %s27, %s26
          %s241 = smul.addr %s240, 64
          %s242 = scalar_lea.hbm %s2, %s241
          %s244 = sshll.u32 %s233, 4
          %s245 = int_to_ptr.vmem [resolvable:$true] %s244
          %247 = dma.vmem_to_hbm [thread:$0]  %s245, 64, %s242, %s230
        $region40: #{tpu_custom_call.1} parent=27 // pred_fallthru
          _
      $region28: #{tpu_custom_call.1} parent=5 // pred_fallthru
        _
      %p248 = scmp.le.s32.totalorder 2, %s17
      // Predicated region
      $region41: #{tpu_custom_call.1} parent=5 // pred_check
        %p249 = pneg %p248
      $region42: #{tpu_custom_call.1} parent=5 // pred_check_branch
        %251 = sbr.rel (%p249) target = $region44
      $region43: #{tpu_custom_call.1} parent=5 // pred_region
        %s252 = ssub.s32 %s17, 2
        // Predicated region
        $region45: #{tpu_custom_call.1} parent=43 // pred_check
          %p253 = pneg %p116
        $region46: #{tpu_custom_call.1} parent=43 // pred_check_branch
          %255 = sbr.rel (%p253) target = $region48
        $region47: #{tpu_custom_call.1} parent=43 // pred_region
          %s256 = sand.u32 %s101, 1
          %s257 = scalar_lea.sflag [#allocation4], %s256
          %s258 = sand.u32 %s101, 1
          %s259 = smul.addr %s258, 4
          %s260 = scalar_lea.vmem [#allocation7], %s259
          %261 = dma.done %s257, 64
        $region48: #{tpu_custom_call.1} parent=43 // pred_fallthru
          _
      $region44: #{tpu_custom_call.1} parent=5 // pred_fallthru
        _
    $region6: #{tpu_custom_call.1} parent=1 // loop_footer
      %s21 = sadd.s32 1, %s17
    $region7: #{tpu_custom_call.1} parent=1 // loop_footer_branch
      %16 = sbr.rel target = $region3
    $region8: #{tpu_custom_call.1} parent=1 // loop_exit
      _
    %262 = vsyncpa [#allocation3], 1
    %s263 = scalar_lea.sflag [#allocation3], 1
    %264 = vsyncpa %s263, 1
    %265 = vsyncpa [#allocation6], 1
    %s266 = scalar_lea.sflag [#allocation6], 1
    %267 = vsyncpa %s266, 1
    %268 = vsyncpa [#allocation4], 1
    %s269 = scalar_lea.sflag [#allocation4], 1
    %270 = vsyncpa %s269, 1

</llo_original>
